<compile_context>
chip_gen: v7x
topology: tpu7x:2x2x1
jax: 0.10.0
libtpu: 0.0.40
codegen_flags: <defaults>
</compile_context>

<pallas_src>
import jax
import jax.numpy as jnp
from jax.experimental import pallas as pl
from jax.experimental.pallas import tpu as pltpu

# ---- "conf" (small synthetic sizes consistent with the module) --------------
NUM_USERS = 20
NUM_ITEMS = 30
MF_DIM = 32
HIDDEN_DIM = 32

_PACKED = HIDDEN_DIM + 2 * MF_DIM                  # h | ue | ie   (= 96 lanes)
_OUT_LANES = -(-_PACKED // 128) * 128              # lane-dense output slab (128)


def _encoder_kernel(ids_ref, u_tab_ref, i_tab_ref, w_ref, b_ref, out_ref):
    b_pad = out_ref.shape[0]                       # static padded batch

    ids = ids_ref[...]                             # (B_pad, 2) int32
    uid = jnp.clip(ids[:, 0:1], 0, NUM_USERS - 1)  # clamp folded into kernel
    iid = jnp.clip(ids[:, 1:2], 0, NUM_ITEMS - 1)

    # Vectorized one-hot gather (no serialized per-row loop, no masked partial
    # stores): mask rows of the VMEM-resident tables and reduce over the vocab
    # axis.  Exact in f32 (sum of one exact value plus zeros).
    onehot_u = (jax.lax.broadcasted_iota(jnp.int32, (b_pad, NUM_USERS), 1)
                == uid).astype(jnp.float32)        # (B_pad, NUM_USERS)
    onehot_i = (jax.lax.broadcasted_iota(jnp.int32, (b_pad, NUM_ITEMS), 1)
                == iid).astype(jnp.float32)        # (B_pad, NUM_ITEMS)
    ue = jnp.sum(onehot_u[:, :, None] * u_tab_ref[...][None, :, :], axis=1)
    ie = jnp.sum(onehot_i[:, :, None] * i_tab_ref[...][None, :, :], axis=1)

    # One batched MXU matmul + tanh for the whole (padded) batch.
    h = jnp.tanh(jnp.dot(ue + ie, w_ref[...],
                         preferred_element_type=jnp.float32) + b_ref[...])

    # Single lane-dense write:  [h | ue | ie | zero-pad] -> (B_pad, 128).
    pieces = [h, ue, ie]
    if _OUT_LANES > _PACKED:
        pieces.append(jnp.zeros((b_pad, _OUT_LANES - _PACKED), jnp.float32))
    out_ref[...] = jnp.concatenate(pieces, axis=1)


@jax.jit
def encoder_forward(user, item, user_table, item_table, w_t, b2):
    """w_t: (MF_DIM, HIDDEN_DIM) pre-transposed Linear weight; b2: (1, HIDDEN_DIM).

    Returns (hidden_state[1, B, H], user_embed[B, D], item_embed[B, D])."""
    B = user.shape[0]
    B_pad = -(-B // 8) * 8                         # sublane-dense batch

    # Single small int32 input: column 0 = user id, column 1 = item id.
    ids = jnp.stack([user.astype(jnp.int32), item.astype(jnp.int32)], axis=1)
    if B_pad != B:                                 # no-op when B % 8 == 0
        ids = jnp.pad(ids, ((0, B_pad - B), (0, 0)))

    out = pl.pallas_call(
        _encoder_kernel,
        grid=(1,),                                 # single grid step
        in_specs=[
            pl.BlockSpec((B_pad, 2), lambda i: (0, 0)),
            # full tables resident in VMEM (a few KB at these sizes)
            pl.BlockSpec((NUM_USERS, MF_DIM), lambda i: (0, 0)),
            pl.BlockSpec((NUM_ITEMS, MF_DIM), lambda i: (0, 0)),
            pl.BlockSpec((MF_DIM, HIDDEN_DIM), lambda i: (0, 0)),
            pl.BlockSpec((1, HIDDEN_DIM), lambda i: (0, 0)),
        ],
        out_specs=pl.BlockSpec((B_pad, _OUT_LANES), lambda i: (0, 0)),
        out_shape=jax.ShapeDtypeStruct((B_pad, _OUT_LANES), jnp.float32),
        compiler_params=pltpu.CompilerParams(
            dimension_semantics=("arbitrary",)),
    )(ids, user_table, item_table, w_t, b2)

    if B_pad != B:                                 # padded rows never escape
        out = out[:B]
    hidden_state = out[:, :HIDDEN_DIM].reshape(1, B, HIDDEN_DIM)   # .view(1,-1,H)
    user_embed = out[:, HIDDEN_DIM:HIDDEN_DIM + MF_DIM]
    item_embed = out[:, HIDDEN_DIM + MF_DIM:_PACKED]
    return hidden_state, user_embed, item_embed


def _reference(user, item, user_table, item_table, w, b):
    ue = user_table[user]
    ie = item_table[item]
    h = jnp.tanh((ue + ie) @ w.T + b).reshape(1, -1, HIDDEN_DIM)
    return h, ue, ie


if __name__ == "__main__":
    key = jax.random.PRNGKey(0)
    k_u, k_i, k_w, k_uid, k_iid = jax.random.split(key, 5)

    # nn.Embedding default init ~ N(0, 1); Linear weight = xavier_uniform, bias = 0
    user_table = jax.random.normal(k_u, (NUM_USERS, MF_DIM), dtype=jnp.float32)
    item_table = jax.random.normal(k_i, (NUM_ITEMS, MF_DIM), dtype=jnp.float32)
    limit = (6.0 / (MF_DIM + HIDDEN_DIM)) ** 0.5
    w = jax.random.uniform(k_w, (HIDDEN_DIM, MF_DIM), dtype=jnp.float32,
                           minval=-limit, maxval=limit)
    b = jnp.zeros((HIDDEN_DIM,), dtype=jnp.float32)

    # Hoisted once (not per call): pre-transposed weight + 2-D bias.
    w_t = jnp.asarray(w.T, dtype=jnp.float32)      # (MF_DIM, HIDDEN_DIM)
    b2 = b.reshape(1, HIDDEN_DIM).astype(jnp.float32)

    B = 8
    user = jax.random.randint(k_uid, (B,), 0, NUM_USERS, dtype=jnp.int32)
    item = jax.random.randint(k_iid, (B,), 0, NUM_ITEMS, dtype=jnp.int32)

    hidden_state, user_embed, item_embed = encoder_forward(
        user, item, user_table, item_table, w_t, b2)
    jax.block_until_ready((hidden_state, user_embed, item_embed))

    h_ref, ue_ref, ie_ref = _reference(user, item, user_table, item_table, w, b)
    assert hidden_state.shape == (1, B, HIDDEN_DIM)
    assert user_embed.shape == (B, MF_DIM) and item_embed.shape == (B, MF_DIM)
    assert jnp.allclose(hidden_state, h_ref, atol=1e-5)
    assert jnp.allclose(user_embed, ue_ref, atol=1e-6)
    assert jnp.allclose(item_embed, ie_ref, atol=1e-6)

    print("KERNEL_OK")
</pallas_src>

<mosaic_0001>
module attributes {stable_mosaic.version = 11 : i64} {
  func.func @_encoder_kernel(%arg0: i32, %arg1: memref<8x2xi32, #tpu.memory_space<vmem>>, %arg2: memref<20x32xf32, #tpu.memory_space<vmem>>, %arg3: memref<30x32xf32, #tpu.memory_space<vmem>>, %arg4: memref<32x32xf32, #tpu.memory_space<vmem>>, %arg5: memref<1x32xf32, #tpu.memory_space<vmem>>, %arg6: memref<8x128xf32, #tpu.memory_space<vmem>>) attributes {dimension_semantics = [#tpu.dimension_semantics<arbitrary>], iteration_bounds = array<i64: 1>, scalar_prefetch = 0 : i64, scratch_operands = 0 : i64, tpu.core_type = #tpu.core_type<tc>, window_params = [{pipeline_mode = #tpu.pipeline_mode<synchronous>, transform_indices = @transform_0, window_bounds = array<i64: 8, 2>}, {pipeline_mode = #tpu.pipeline_mode<synchronous>, transform_indices = @transform_1, window_bounds = array<i64: 20, 32>}, {pipeline_mode = #tpu.pipeline_mode<synchronous>, transform_indices = @transform_2, window_bounds = array<i64: 30, 32>}, {pipeline_mode = #tpu.pipeline_mode<synchronous>, transform_indices = @transform_3, window_bounds = array<i64: 32, 32>}, {pipeline_mode = #tpu.pipeline_mode<synchronous>, transform_indices = @transform_4, window_bounds = array<i64: 1, 32>}, {pipeline_mode = #tpu.pipeline_mode<synchronous>, transform_indices = @transform_5, window_bounds = array<i64: 8, 128>}]} {
    %c0 = arith.constant 0 : index
    %c0_0 = arith.constant 0 : index
    %0 = vector.load %arg1[%c0, %c0_0] : memref<8x2xi32, #tpu.memory_space<vmem>>, vector<8x2xi32>
    %1 = vector.extract_strided_slice %0 {offsets = [0, 0], sizes = [8, 1], strides = [1, 1]} : vector<8x2xi32> to vector<8x1xi32>
    %c0_i32 = arith.constant 0 : i32
    %c19_i32 = arith.constant 19 : i32
    %2 = vector.broadcast %c0_i32 : i32 to vector<8x1xi32>
    %3 = arith.maxsi %2, %1 : vector<8x1xi32>
    %4 = vector.broadcast %c19_i32 : i32 to vector<8x1xi32>
    %5 = arith.minsi %4, %3 : vector<8x1xi32>
    %6 = vector.extract_strided_slice %0 {offsets = [0, 1], sizes = [8, 1], strides = [1, 1]} : vector<8x2xi32> to vector<8x1xi32>
    %c0_i32_1 = arith.constant 0 : i32
    %c29_i32 = arith.constant 29 : i32
    %7 = vector.broadcast %c0_i32_1 : i32 to vector<8x1xi32>
    %8 = arith.maxsi %7, %6 : vector<8x1xi32>
    %9 = vector.broadcast %c29_i32 : i32 to vector<8x1xi32>
    %10 = arith.minsi %9, %8 : vector<8x1xi32>
    %11 = tpu.iota {dimensions = array<i32: 1>} : vector<8x20xi32>
    %12 = vector.broadcast %5 : vector<8x1xi32> to vector<8x20xi32>
    %13 = arith.cmpi eq, %11, %12 : vector<8x20xi32>
    %14 = arith.extui %13 : vector<8x20xi1> to vector<8x20xi32>
    %15 = arith.sitofp %14 : vector<8x20xi32> to vector<8x20xf32>
    %16 = tpu.iota {dimensions = array<i32: 1>} : vector<8x30xi32>
    %17 = vector.broadcast %10 : vector<8x1xi32> to vector<8x30xi32>
    %18 = arith.cmpi eq, %16, %17 : vector<8x30xi32>
    %19 = arith.extui %18 : vector<8x30xi1> to vector<8x30xi32>
    %20 = arith.sitofp %19 : vector<8x30xi32> to vector<8x30xf32>
    %21 = vector.shape_cast %15 : vector<8x20xf32> to vector<8x20x1xf32>
    %c0_2 = arith.constant 0 : index
    %c0_3 = arith.constant 0 : index
    %22 = vector.load %arg2[%c0_2, %c0_3] : memref<20x32xf32, #tpu.memory_space<vmem>>, vector<20x32xf32>
    %23 = vector.shape_cast %22 : vector<20x32xf32> to vector<1x20x32xf32>
    %24 = vector.broadcast %21 : vector<8x20x1xf32> to vector<8x20x32xf32>
    %25 = vector.broadcast %23 : vector<1x20x32xf32> to vector<8x20x32xf32>
    %26 = arith.mulf %24, %25 : vector<8x20x32xf32>
    %cst = arith.constant dense<0.000000e+00> : vector<8x32xf32>
    %27 = vector.multi_reduction <add>, %26, %cst [1] : vector<8x20x32xf32> to vector<8x32xf32>
    %28 = vector.shape_cast %20 : vector<8x30xf32> to vector<8x30x1xf32>
    %c0_4 = arith.constant 0 : index
    %c0_5 = arith.constant 0 : index
    %29 = vector.load %arg3[%c0_4, %c0_5] : memref<30x32xf32, #tpu.memory_space<vmem>>, vector<30x32xf32>
    %30 = vector.shape_cast %29 : vector<30x32xf32> to vector<1x30x32xf32>
    %31 = vector.broadcast %28 : vector<8x30x1xf32> to vector<8x30x32xf32>
    %32 = vector.broadcast %30 : vector<1x30x32xf32> to vector<8x30x32xf32>
    %33 = arith.mulf %31, %32 : vector<8x30x32xf32>
    %cst_6 = arith.constant dense<0.000000e+00> : vector<8x32xf32>
    %34 = vector.multi_reduction <add>, %33, %cst_6 [1] : vector<8x30x32xf32> to vector<8x32xf32>
    %35 = arith.addf %27, %34 : vector<8x32xf32>
    %c0_7 = arith.constant 0 : index
    %c0_8 = arith.constant 0 : index
    %36 = vector.load %arg4[%c0_7, %c0_8] : memref<32x32xf32, #tpu.memory_space<vmem>>, vector<32x32xf32>
    %cst_9 = arith.constant dense<0.000000e+00> : vector<8x32xf32>
    %37 = tpu.matmul %35, %36, %cst_9 {dimension_numbers = #tpu.dot_dimension_numbers<[1], [0], [0], [1], [0, 0, 1, 1], [], []>} : vector<8x32xf32>, vector<32x32xf32>, vector<8x32xf32> -> vector<8x32xf32>
    %c0_10 = arith.constant 0 : index
    %c0_11 = arith.constant 0 : index
    %38 = vector.load %arg5[%c0_10, %c0_11] : memref<1x32xf32, #tpu.memory_space<vmem>>, vector<1x32xf32>
    %39 = vector.broadcast %38 : vector<1x32xf32> to vector<8x32xf32>
    %40 = arith.addf %37, %39 : vector<8x32xf32>
    %41 = math.tanh %40 : vector<8x32xf32>
    %cst_12 = arith.constant 0.000000e+00 : f32
    %42 = vector.broadcast %cst_12 : f32 to vector<8x32xf32>
    %43 = tpu.concatenate %41, %27, %34, %42 in 1 : vector<8x32xf32>, vector<8x32xf32>, vector<8x32xf32>, vector<8x32xf32> -> vector<8x128xf32>
    %c0_13 = arith.constant 0 : index
    %c0_14 = arith.constant 0 : index
    %44 = vector.load %arg6[%c0_13, %c0_14] : memref<8x128xf32, #tpu.memory_space<vmem>>, vector<8x128xf32>
    tpu.vector_store %arg6[%c0_13, %c0_14], %43 {strides = array<i32>} : memref<8x128xf32, #tpu.memory_space<vmem>>, vector<8x128xf32>,
    return
  }
  func.func @transform_0(%arg0: i32) -> (i32, i32) {
    %c0_i32 = arith.constant 0 : i32
    %c0_i32_0 = arith.constant 0 : i32
    %c0_i32_1 = arith.constant 0 : i32
    return %c0_i32, %c0_i32_0 : i32, i32
  }
  func.func @transform_1(%arg0: i32) -> (i32, i32) {
    %c0_i32 = arith.constant 0 : i32
    %c0_i32_0 = arith.constant 0 : i32
    %c0_i32_1 = arith.constant 0 : i32
    return %c0_i32, %c0_i32_0 : i32, i32
  }
  func.func @transform_2(%arg0: i32) -> (i32, i32) {
    %c0_i32 = arith.constant 0 : i32
    %c0_i32_0 = arith.constant 0 : i32
    %c0_i32_1 = arith.constant 0 : i32
    return %c0_i32, %c0_i32_0 : i32, i32
  }
  func.func @transform_3(%arg0: i32) -> (i32, i32) {
    %c0_i32 = arith.constant 0 : i32
    %c0_i32_0 = arith.constant 0 : i32
    %c0_i32_1 = arith.constant 0 : i32
    return %c0_i32, %c0_i32_0 : i32, i32
  }
  func.func @transform_4(%arg0: i32) -> (i32, i32) {
    %c0_i32 = arith.constant 0 : i32
    %c0_i32_0 = arith.constant 0 : i32
    %c0_i32_1 = arith.constant 0 : i32
    return %c0_i32, %c0_i32_0 : i32, i32
  }
  func.func @transform_5(%arg0: i32) -> (i32, i32) {
    %c0_i32 = arith.constant 0 : i32
    %c0_i32_0 = arith.constant 0 : i32
    %c0_i32_1 = arith.constant 0 : i32
    return %c0_i32, %c0_i32_0 : i32, i32
  }
}

</mosaic_0001>

<llo_original>
// kernel: encoder_forward.1
$region0: #{encoder_forward.1}
  #allocation0 [shape = 'u32[]', space=smem, size = 0x4, offset = 0x4, fixed_abs, tag = 'smem constant byte address 0x4 - core index']
  #allocation1 [shape = 'u32[144,128]{1,0:T(1,128)}', space=vmem, size = 0x12000, scoped, tag = 'internal scratch']
  %s0 = inlined_call_operand.vmem [shape: s32[8,2], index: 0, kind: input, shape index: {}]
  %s1 = inlined_call_operand.hbm [shape: f32[20,32], index: 1, kind: input, shape index: {}]
  %s2 = inlined_call_operand.vmem [shape: f32[30,32], index: 2, kind: input, shape index: {}]
  %s3 = inlined_call_operand.hbm [shape: f32[32,32], index: 3, kind: input, shape index: {}]
  %s4 = inlined_call_operand.vmem [shape: f32[1,32], index: 4, kind: input, shape index: {}]
  %s5 = inlined_call_operand.vmem [shape: f32[8,128], index: 5, kind: output, shape index: {}]
  %s6 = sld [smem:[#allocation0]]
  $region38: #{encoder_forward.1} parent=0
    _
  %s8 = ssub.s32 1, %s6
  %s9 = scalar_select 0, %s8, %s6
  $region1: #{encoder_forward.1} parent=0
    #allocation2 [shape = 'u8[12288]{0}', space=vmem, size = 0x3000, scoped, tag = 'input window, operand 1, single buffered']
    #allocation3 [shape = 's32[1]{0}', space=sflag, size = 0x4, scoped, tag = 'scoped memory for encoder_forward.1']
    #allocation4 [shape = 'u8[16384]{0}', space=vmem, size = 0x4000, scoped, tag = 'input window, operand 3, single buffered']
    #allocation5 [shape = 's32[1]{0}', space=sflag, size = 0x4, scoped, tag = 'scoped memory for encoder_forward.1']
    %10 = vsyncpa [#allocation3], 0
    %11 = vsyncpa [#allocation5], 0
    // Predicated region
    $region2: #{encoder_forward.1} parent=1 // pred_check
      _
    $region3: #{encoder_forward.1} parent=1 // pred_check_branch
      %13 = sbr.rel (0) target = $region5
    $region4: #{encoder_forward.1} parent=1 // pred_region
      _
    $region5: #{encoder_forward.1} parent=1 // pred_fallthru
      _
    // Predicated region
    $region6: #{encoder_forward.1} parent=1 // pred_check
      _
    $region7: #{encoder_forward.1} parent=1 // pred_check_branch
      %15 = sbr.rel (0) target = $region9
    $region8: #{encoder_forward.1} parent=1 // pred_region
      %s17 = ssub.s32 384, 384
      %18 = vsyncadd [#allocation3], %s17
      %s19 = sshll.u32 [#allocation2], 4
      %s20 = int_to_ptr.vmem [resolvable:$true] %s19
      %25 = dma.hbm_to_vmem [thread:$0]  %s1, 384, %s20, [#allocation3], 128, 128, 8
    $region9: #{encoder_forward.1} parent=1 // pred_fallthru
      _
    // Predicated region
    $region10: #{encoder_forward.1} parent=1 // pred_check
      _
    $region11: #{encoder_forward.1} parent=1 // pred_check_branch
      %27 = sbr.rel (0) target = $region13
    $region12: #{encoder_forward.1} parent=1 // pred_region
      _
    $region13: #{encoder_forward.1} parent=1 // pred_fallthru
      _
    // Predicated region
    $region14: #{encoder_forward.1} parent=1 // pred_check
      _
    $region15: #{encoder_forward.1} parent=1 // pred_check_branch
      %29 = sbr.rel (0) target = $region17
    $region16: #{encoder_forward.1} parent=1 // pred_region
      %s31 = ssub.s32 512, 512
      %32 = vsyncadd [#allocation5], %s31
      %s33 = sshll.u32 [#allocation4], 4
      %s34 = int_to_ptr.vmem [resolvable:$true] %s33
      %39 = dma.hbm_to_vmem [thread:$0]  %s3, 512, %s34, [#allocation5], 128, 128, 8
    $region17: #{encoder_forward.1} parent=1 // pred_fallthru
      _
    // Predicated region
    $region18: #{encoder_forward.1} parent=1 // pred_check
      _
    $region19: #{encoder_forward.1} parent=1 // pred_check_branch
      %41 = sbr.rel (0) target = $region21
    $region20: #{encoder_forward.1} parent=1 // pred_region
      _
    $region21: #{encoder_forward.1} parent=1 // pred_fallthru
      _
    // Predicated region
    $region22: #{encoder_forward.1} parent=1 // pred_check
      _
    $region23: #{encoder_forward.1} parent=1 // pred_check_branch
      %43 = sbr.rel (0) target = $region25
    $region24: #{encoder_forward.1} parent=1 // pred_region
      %44 = dma.done [#allocation3], 384
    $region25: #{encoder_forward.1} parent=1 // pred_fallthru
      _
    // Predicated region
    $region26: #{encoder_forward.1} parent=1 // pred_check
      _
    $region27: #{encoder_forward.1} parent=1 // pred_check_branch
      %46 = sbr.rel (0) target = $region29
    $region28: #{encoder_forward.1} parent=1 // pred_region
      %47 = dma.done [#allocation5], 512
    $region29: #{encoder_forward.1} parent=1 // pred_fallthru
      _
    %v48 = vld [vmem:[%s0] sm:$0xff]
    %vm49 = vcmp.gt.s32.totalorder %v48, 0
    %v50 = vsel %vm49, %v48, 0
    %vm51 = vcmp.lt.s32.totalorder %v50, 19
    %v52 = vsel %vm51, %v50, 19
    %vm53 = vcmp.lt.s32.totalorder %v50, 29
    %v54 = vsel %vm53, %v50, 29
    %v55 = vlaneseq
    %v56 = vand.u32 %v55, 127
    %57 = vset.pattern.permute.xlu0 0
    %58 = vperm.xlu0 %57, %v52
    %v59 = vpop.permute.xlu0 %58
    %vm60 = vcmp.eq.s32.totalorder %v56, %v59
    %v61 = vsel %vm60, 1, 0
    %v62 = vcvt.s32.f32 %v61
    %63 = vset.pattern.permute.xlu0 1
    %64 = vperm.xlu0 %63, %v54
    %v65 = vpop.permute.xlu0 %64
    %vm66 = vcmp.eq.s32.totalorder %v56, %v65
    %v67 = vsel %vm66, 1, 0
    %v68 = vcvt.s32.f32 %v67
    %v69 = vlaneseq
    %v70 = vshrl.u32 %v69, 7
    %v71 = vsub.s32 0, %v70
    %v72 = vrot.slane %v62, %v71
    %74 = vbcast.lane.b32.xlu0 %v72, 256
    %v75 = vpop.permute.xlu0 %74
    %s77 = sor.u32 256, 8
    %78 = vbcast.lane.b32.xlu0 %v72, %s77
    %v79 = vpop.permute.xlu0 %78
    %s81 = sor.u32 256, 16
    %82 = vbcast.lane.b32.xlu0 %v72, %s81
    %v83 = vpop.permute.xlu0 %82
    %v84 = vlaneseq
    %v85 = vshrl.u32 %v84, 7
    %v86 = vsub.s32 1, %v85
    %v87 = vrot.slane %v62, %v86
    %89 = vbcast.lane.b32.xlu0 %v87, 256
    %v90 = vpop.permute.xlu0 %89
    %s92 = sor.u32 256, 8
    %93 = vbcast.lane.b32.xlu0 %v87, %s92
    %v94 = vpop.permute.xlu0 %93
    %s96 = sor.u32 256, 16
    %97 = vbcast.lane.b32.xlu0 %v87, %s96
    %v98 = vpop.permute.xlu0 %97
    %v99 = vlaneseq
    %v100 = vshrl.u32 %v99, 7
    %v101 = vsub.s32 2, %v100
    %v102 = vrot.slane %v62, %v101
    %104 = vbcast.lane.b32.xlu0 %v102, 256
    %v105 = vpop.permute.xlu0 %104
    %s107 = sor.u32 256, 8
    %108 = vbcast.lane.b32.xlu0 %v102, %s107
    %v109 = vpop.permute.xlu0 %108
    %s111 = sor.u32 256, 16
    %112 = vbcast.lane.b32.xlu0 %v102, %s111
    %v113 = vpop.permute.xlu0 %112
    %v114 = vlaneseq
    %v115 = vshrl.u32 %v114, 7
    %v116 = vsub.s32 3, %v115
    %v117 = vrot.slane %v62, %v116
    %119 = vbcast.lane.b32.xlu0 %v117, 256
    %v120 = vpop.permute.xlu0 %119
    %s122 = sor.u32 256, 8
    %123 = vbcast.lane.b32.xlu0 %v117, %s122
    %v124 = vpop.permute.xlu0 %123
    %s126 = sor.u32 256, 16
    %127 = vbcast.lane.b32.xlu0 %v117, %s126
    %v128 = vpop.permute.xlu0 %127
    %v129 = vlaneseq
    %v130 = vshrl.u32 %v129, 7
    %v131 = vsub.s32 4, %v130
    %v132 = vrot.slane %v62, %v131
    %134 = vbcast.lane.b32.xlu0 %v132, 256
    %v135 = vpop.permute.xlu0 %134
    %s137 = sor.u32 256, 8
    %138 = vbcast.lane.b32.xlu0 %v132, %s137
    %v139 = vpop.permute.xlu0 %138
    %s141 = sor.u32 256, 16
    %142 = vbcast.lane.b32.xlu0 %v132, %s141
    %v143 = vpop.permute.xlu0 %142
    %v144 = vlaneseq
    %v145 = vshrl.u32 %v144, 7
    %v146 = vsub.s32 5, %v145
    %v147 = vrot.slane %v62, %v146
    %149 = vbcast.lane.b32.xlu0 %v147, 256
    %v150 = vpop.permute.xlu0 %149
    %s152 = sor.u32 256, 8
    %153 = vbcast.lane.b32.xlu0 %v147, %s152
    %v154 = vpop.permute.xlu0 %153
    %s156 = sor.u32 256, 16
    %157 = vbcast.lane.b32.xlu0 %v147, %s156
    %v158 = vpop.permute.xlu0 %157
    %v159 = vlaneseq
    %v160 = vshrl.u32 %v159, 7
    %v161 = vsub.s32 6, %v160
    %v162 = vrot.slane %v62, %v161
    %164 = vbcast.lane.b32.xlu0 %v162, 256
    %v165 = vpop.permute.xlu0 %164
    %s167 = sor.u32 256, 8
    %168 = vbcast.lane.b32.xlu0 %v162, %s167
    %v169 = vpop.permute.xlu0 %168
    %s171 = sor.u32 256, 16
    %172 = vbcast.lane.b32.xlu0 %v162, %s171
    %v173 = vpop.permute.xlu0 %172
    %v174 = vlaneseq
    %v175 = vshrl.u32 %v174, 7
    %v176 = vsub.s32 7, %v175
    %v177 = vrot.slane %v62, %v176
    %179 = vbcast.lane.b32.xlu0 %v177, 256
    %v180 = vpop.permute.xlu0 %179
    %s182 = sor.u32 256, 8
    %183 = vbcast.lane.b32.xlu0 %v177, %s182
    %v184 = vpop.permute.xlu0 %183
    %s186 = sor.u32 256, 16
    %187 = vbcast.lane.b32.xlu0 %v177, %s186
    %v188 = vpop.permute.xlu0 %187
    %v189 = vld [vmem:[#allocation2] sm:$0xff]
    %v190 = vld [vmem:[#allocation2 + $0x8] sm:$0xff]
    %v191 = vld [vmem:[#allocation2 + $0x10] sm:$0xf]
    %v192 = vmul.f32 %v75, %v189
    %v193 = vmul.f32 %v79, %v190
    %v194 = vmul.f32 %v83, %v191
    %v195 = vmul.f32 %v90, %v189
    %v196 = vmul.f32 %v94, %v190
    %v197 = vmul.f32 %v98, %v191
    %v198 = vmul.f32 %v105, %v189
    %v199 = vmul.f32 %v109, %v190
    %v200 = vmul.f32 %v113, %v191
    %v201 = vmul.f32 %v120, %v189
    %v202 = vmul.f32 %v124, %v190
    %v203 = vmul.f32 %v128, %v191
    %v204 = vmul.f32 %v135, %v189
    %v205 = vmul.f32 %v139, %v190
    %v206 = vmul.f32 %v143, %v191
    %v207 = vmul.f32 %v150, %v189
    %v208 = vmul.f32 %v154, %v190
    %v209 = vmul.f32 %v158, %v191
    %v210 = vmul.f32 %v165, %v189
    %v211 = vmul.f32 %v169, %v190
    %v212 = vmul.f32 %v173, %v191
    %v213 = vmul.f32 %v180, %v189
    %v214 = vmul.f32 %v184, %v190
    %v215 = vmul.f32 %v188, %v191
    %vm216 = vcmask 261120
    %v217 = vsel %vm216, %v192, 0.0
    %v218 = vsel %vm216, %v193, 0.0
    %v219 = vadd.f32 %v217, %v218
    %vm220 = vcmask 257024
    %v221 = vsel %vm220, %v194, 0.0
    %v222 = vadd.f32 %v219, %v221
    %v223 = vrot.slane %v222, 4
    %v224 = vadd.f32 %v222, %v223
    %v225 = vrot.slane %v224, 2
    %v226 = vadd.f32 %v224, %v225
    %v227 = vrot.slane %v226, 1
    %v228 = vadd.f32 %v226, %v227
    %v229 = vsel %vm216, %v195, 0.0
    %v230 = vsel %vm216, %v196, 0.0
    %v231 = vadd.f32 %v229, %v230
    %v232 = vsel %vm220, %v197, 0.0
    %v233 = vadd.f32 %v231, %v232
    %v234 = vrot.slane %v233, 4
    %v235 = vadd.f32 %v233, %v234
    %v236 = vrot.slane %v235, 2
    %v237 = vadd.f32 %v235, %v236
    %v238 = vrot.slane %v237, 1
    %v239 = vadd.f32 %v237, %v238
    %v240 = vsel %vm216, %v198, 0.0
    %v241 = vsel %vm216, %v199, 0.0
    %v242 = vadd.f32 %v240, %v241
    %v243 = vsel %vm220, %v200, 0.0
    %v244 = vadd.f32 %v242, %v243
    %v245 = vrot.slane %v244, 4
    %v246 = vadd.f32 %v244, %v245
    %v247 = vrot.slane %v246, 2
    %v248 = vadd.f32 %v246, %v247
    %v249 = vrot.slane %v248, 1
    %v250 = vadd.f32 %v248, %v249
    %v251 = vsel %vm216, %v201, 0.0
    %v252 = vsel %vm216, %v202, 0.0
    %v253 = vadd.f32 %v251, %v252
    %v254 = vsel %vm220, %v203, 0.0
    %v255 = vadd.f32 %v253, %v254
    %v256 = vrot.slane %v255, 4
    %v257 = vadd.f32 %v255, %v256
    %v258 = vrot.slane %v257, 2
    %v259 = vadd.f32 %v257, %v258
    %v260 = vrot.slane %v259, 1
    %v261 = vadd.f32 %v259, %v260
    %v262 = vsel %vm216, %v204, 0.0
    %v263 = vsel %vm216, %v205, 0.0
    %v264 = vadd.f32 %v262, %v263
    %v265 = vsel %vm220, %v206, 0.0
    %v266 = vadd.f32 %v264, %v265
    %v267 = vrot.slane %v266, 4
    %v268 = vadd.f32 %v266, %v267
    %v269 = vrot.slane %v268, 2
    %v270 = vadd.f32 %v268, %v269
    %v271 = vrot.slane %v270, 1
    %v272 = vadd.f32 %v270, %v271
    %v273 = vsel %vm216, %v207, 0.0
    %v274 = vsel %vm216, %v208, 0.0
    %v275 = vadd.f32 %v273, %v274
    %v276 = vsel %vm220, %v209, 0.0
    %v277 = vadd.f32 %v275, %v276
    %v278 = vrot.slane %v277, 4
    %v279 = vadd.f32 %v277, %v278
    %v280 = vrot.slane %v279, 2
    %v281 = vadd.f32 %v279, %v280
    %v282 = vrot.slane %v281, 1
    %v283 = vadd.f32 %v281, %v282
    %v284 = vsel %vm216, %v210, 0.0
    %v285 = vsel %vm216, %v211, 0.0
    %v286 = vadd.f32 %v284, %v285
    %v287 = vsel %vm220, %v212, 0.0
    %v288 = vadd.f32 %v286, %v287
    %v289 = vrot.slane %v288, 4
    %v290 = vadd.f32 %v288, %v289
    %v291 = vrot.slane %v290, 2
    %v292 = vadd.f32 %v290, %v291
    %v293 = vrot.slane %v292, 1
    %v294 = vadd.f32 %v292, %v293
    %v295 = vsel %vm216, %v213, 0.0
    %v296 = vsel %vm216, %v214, 0.0
    %v297 = vadd.f32 %v295, %v296
    %v298 = vsel %vm220, %v215, 0.0
    %v299 = vadd.f32 %v297, %v298
    %v300 = vrot.slane %v299, 4
    %v301 = vadd.f32 %v299, %v300
    %v302 = vrot.slane %v301, 2
    %v303 = vadd.f32 %v301, %v302
    %v304 = vrot.slane %v303, 1
    %v305 = vadd.f32 %v303, %v304
    %v306 = vlaneseq
    %v307 = vshrl.u32 %v306, 7
    %v308 = vsub.s32 0, %v307
    %v309 = vrot.slane %v68, %v308
    %311 = vbcast.lane.b32.xlu0 %v309, 256
    %v312 = vpop.permute.xlu0 %311
    %s314 = sor.u32 256, 8
    %315 = vbcast.lane.b32.xlu0 %v309, %s314
    %v316 = vpop.permute.xlu0 %315
    %s318 = sor.u32 256, 16
    %319 = vbcast.lane.b32.xlu0 %v309, %s318
    %v320 = vpop.permute.xlu0 %319
    %s322 = sor.u32 256, 24
    %323 = vbcast.lane.b32.xlu0 %v309, %s322
    %v324 = vpop.permute.xlu0 %323
    %v325 = vlaneseq
    %v326 = vshrl.u32 %v325, 7
    %v327 = vsub.s32 1, %v326
    %v328 = vrot.slane %v68, %v327
    %330 = vbcast.lane.b32.xlu0 %v328, 256
    %v331 = vpop.permute.xlu0 %330
    %s333 = sor.u32 256, 8
    %334 = vbcast.lane.b32.xlu0 %v328, %s333
    %v335 = vpop.permute.xlu0 %334
    %s337 = sor.u32 256, 16
    %338 = vbcast.lane.b32.xlu0 %v328, %s337
    %v339 = vpop.permute.xlu0 %338
    %s341 = sor.u32 256, 24
    %342 = vbcast.lane.b32.xlu0 %v328, %s341
    %v343 = vpop.permute.xlu0 %342
    %v344 = vlaneseq
    %v345 = vshrl.u32 %v344, 7
    %v346 = vsub.s32 2, %v345
    %v347 = vrot.slane %v68, %v346
    %349 = vbcast.lane.b32.xlu0 %v347, 256
    %v350 = vpop.permute.xlu0 %349
    %s352 = sor.u32 256, 8
    %353 = vbcast.lane.b32.xlu0 %v347, %s352
    %v354 = vpop.permute.xlu0 %353
    %s356 = sor.u32 256, 16
    %357 = vbcast.lane.b32.xlu0 %v347, %s356
    %v358 = vpop.permute.xlu0 %357
    %s360 = sor.u32 256, 24
    %361 = vbcast.lane.b32.xlu0 %v347, %s360
    %v362 = vpop.permute.xlu0 %361
    %v363 = vlaneseq
    %v364 = vshrl.u32 %v363, 7
    %v365 = vsub.s32 3, %v364
    %v366 = vrot.slane %v68, %v365
    %368 = vbcast.lane.b32.xlu0 %v366, 256
    %v369 = vpop.permute.xlu0 %368
    %s371 = sor.u32 256, 8
    %372 = vbcast.lane.b32.xlu0 %v366, %s371
    %v373 = vpop.permute.xlu0 %372
    %s375 = sor.u32 256, 16
    %376 = vbcast.lane.b32.xlu0 %v366, %s375
    %v377 = vpop.permute.xlu0 %376
    %s379 = sor.u32 256, 24
    %380 = vbcast.lane.b32.xlu0 %v366, %s379
    %v381 = vpop.permute.xlu0 %380
    %v382 = vlaneseq
    %v383 = vshrl.u32 %v382, 7
    %v384 = vsub.s32 4, %v383
    %v385 = vrot.slane %v68, %v384
    %387 = vbcast.lane.b32.xlu0 %v385, 256
    %v388 = vpop.permute.xlu0 %387
    %s390 = sor.u32 256, 8
    %391 = vbcast.lane.b32.xlu0 %v385, %s390
    %v392 = vpop.permute.xlu0 %391
    %s394 = sor.u32 256, 16
    %395 = vbcast.lane.b32.xlu0 %v385, %s394
    %v396 = vpop.permute.xlu0 %395
    %s398 = sor.u32 256, 24
    %399 = vbcast.lane.b32.xlu0 %v385, %s398
    %v400 = vpop.permute.xlu0 %399
    %v401 = vlaneseq
    %v402 = vshrl.u32 %v401, 7
    %v403 = vsub.s32 5, %v402
    %v404 = vrot.slane %v68, %v403
    %406 = vbcast.lane.b32.xlu0 %v404, 256
    %v407 = vpop.permute.xlu0 %406
    %s409 = sor.u32 256, 8
    %410 = vbcast.lane.b32.xlu0 %v404, %s409
    %v411 = vpop.permute.xlu0 %410
    %s413 = sor.u32 256, 16
    %414 = vbcast.lane.b32.xlu0 %v404, %s413
    %v415 = vpop.permute.xlu0 %414
    %s417 = sor.u32 256, 24
    %418 = vbcast.lane.b32.xlu0 %v404, %s417
    %v419 = vpop.permute.xlu0 %418
    %v420 = vlaneseq
    %v421 = vshrl.u32 %v420, 7
    %v422 = vsub.s32 6, %v421
    %v423 = vrot.slane %v68, %v422
    %425 = vbcast.lane.b32.xlu0 %v423, 256
    %v426 = vpop.permute.xlu0 %425
    %s428 = sor.u32 256, 8
    %429 = vbcast.lane.b32.xlu0 %v423, %s428
    %v430 = vpop.permute.xlu0 %429
    %s432 = sor.u32 256, 16
    %433 = vbcast.lane.b32.xlu0 %v423, %s432
    %v434 = vpop.permute.xlu0 %433
    %s436 = sor.u32 256, 24
    %437 = vbcast.lane.b32.xlu0 %v423, %s436
    %v438 = vpop.permute.xlu0 %437
    %v439 = vlaneseq
    %v440 = vshrl.u32 %v439, 7
    %v441 = vsub.s32 7, %v440
    %v442 = vrot.slane %v68, %v441
    %444 = vbcast.lane.b32.xlu0 %v442, 256
    %v445 = vpop.permute.xlu0 %444
    %s447 = sor.u32 256, 8
    %448 = vbcast.lane.b32.xlu0 %v442, %s447
    %v449 = vpop.permute.xlu0 %448
    %s451 = sor.u32 256, 16
    %452 = vbcast.lane.b32.xlu0 %v442, %s451
    %v453 = vpop.permute.xlu0 %452
    %s455 = sor.u32 256, 24
    %456 = vbcast.lane.b32.xlu0 %v442, %s455
    %v457 = vpop.permute.xlu0 %456
    %v458 = vld [vmem:[%s2] sm:$0xff]
    %v459 = vld [vmem:[%s2 + $0x8] sm:$0xff]
    %v460 = vld [vmem:[%s2 + $0x10] sm:$0xff]
    %v461 = vld [vmem:[%s2 + $0x18] sm:$0x3f]
    %v462 = vmul.f32 %v312, %v458
    %v463 = vmul.f32 %v316, %v459
    %v464 = vmul.f32 %v320, %v460
    %v465 = vmul.f32 %v324, %v461
    %v466 = vmul.f32 %v331, %v458
    %v467 = vmul.f32 %v335, %v459
    %v468 = vmul.f32 %v339, %v460
    %v469 = vmul.f32 %v343, %v461
    %v470 = vmul.f32 %v350, %v458
    %v471 = vmul.f32 %v354, %v459
    %v472 = vmul.f32 %v358, %v460
    %v473 = vmul.f32 %v362, %v461
    %v474 = vmul.f32 %v369, %v458
    %v475 = vmul.f32 %v373, %v459
    %v476 = vmul.f32 %v377, %v460
    %v477 = vmul.f32 %v381, %v461
    %v478 = vmul.f32 %v388, %v458
    %v479 = vmul.f32 %v392, %v459
    %v480 = vmul.f32 %v396, %v460
    %v481 = vmul.f32 %v400, %v461
    %v482 = vmul.f32 %v407, %v458
    %v483 = vmul.f32 %v411, %v459
    %v484 = vmul.f32 %v415, %v460
    %v485 = vmul.f32 %v419, %v461
    %v486 = vmul.f32 %v426, %v458
    %v487 = vmul.f32 %v430, %v459
    %v488 = vmul.f32 %v434, %v460
    %v489 = vmul.f32 %v438, %v461
    %v490 = vmul.f32 %v445, %v458
    %v491 = vmul.f32 %v449, %v459
    %v492 = vmul.f32 %v453, %v460
    %v493 = vmul.f32 %v457, %v461
    %v494 = vsel %vm216, %v462, 0.0
    %v495 = vsel %vm216, %v463, 0.0
    %v496 = vadd.f32 %v494, %v495
    %v497 = vsel %vm216, %v464, 0.0
    %v498 = vadd.f32 %v496, %v497
    %vm499 = vcmask 259072
    %v500 = vsel %vm499, %v465, 0.0
    %v501 = vadd.f32 %v498, %v500
    %v502 = vrot.slane %v501, 4
    %v503 = vadd.f32 %v501, %v502
    %v504 = vrot.slane %v503, 2
    %v505 = vadd.f32 %v503, %v504
    %v506 = vrot.slane %v505, 1
    %v507 = vadd.f32 %v505, %v506
    %v508 = vsel %vm216, %v466, 0.0
    %v509 = vsel %vm216, %v467, 0.0
    %v510 = vadd.f32 %v508, %v509
    %v511 = vsel %vm216, %v468, 0.0
    %v512 = vadd.f32 %v510, %v511
    %v513 = vsel %vm499, %v469, 0.0
    %v514 = vadd.f32 %v512, %v513
    %v515 = vrot.slane %v514, 4
    %v516 = vadd.f32 %v514, %v515
    %v517 = vrot.slane %v516, 2
    %v518 = vadd.f32 %v516, %v517
    %v519 = vrot.slane %v518, 1
    %v520 = vadd.f32 %v518, %v519
    %v521 = vsel %vm216, %v470, 0.0
    %v522 = vsel %vm216, %v471, 0.0
    %v523 = vadd.f32 %v521, %v522
    %v524 = vsel %vm216, %v472, 0.0
    %v525 = vadd.f32 %v523, %v524
    %v526 = vsel %vm499, %v473, 0.0
    %v527 = vadd.f32 %v525, %v526
    %v528 = vrot.slane %v527, 4
    %v529 = vadd.f32 %v527, %v528
    %v530 = vrot.slane %v529, 2
    %v531 = vadd.f32 %v529, %v530
    %v532 = vrot.slane %v531, 1
    %v533 = vadd.f32 %v531, %v532
    %v534 = vsel %vm216, %v474, 0.0
    %v535 = vsel %vm216, %v475, 0.0
    %v536 = vadd.f32 %v534, %v535
    %v537 = vsel %vm216, %v476, 0.0
    %v538 = vadd.f32 %v536, %v537
    %v539 = vsel %vm499, %v477, 0.0
    %v540 = vadd.f32 %v538, %v539
    %v541 = vrot.slane %v540, 4
    %v542 = vadd.f32 %v540, %v541
    %v543 = vrot.slane %v542, 2
    %v544 = vadd.f32 %v542, %v543
    %v545 = vrot.slane %v544, 1
    %v546 = vadd.f32 %v544, %v545
    %v547 = vsel %vm216, %v478, 0.0
    %v548 = vsel %vm216, %v479, 0.0
    %v549 = vadd.f32 %v547, %v548
    %v550 = vsel %vm216, %v480, 0.0
    %v551 = vadd.f32 %v549, %v550
    %v552 = vsel %vm499, %v481, 0.0
    %v553 = vadd.f32 %v551, %v552
    %v554 = vrot.slane %v553, 4
    %v555 = vadd.f32 %v553, %v554
    %v556 = vrot.slane %v555, 2
    %v557 = vadd.f32 %v555, %v556
    %v558 = vrot.slane %v557, 1
    %v559 = vadd.f32 %v557, %v558
    %v560 = vsel %vm216, %v482, 0.0
    %v561 = vsel %vm216, %v483, 0.0
    %v562 = vadd.f32 %v560, %v561
    %v563 = vsel %vm216, %v484, 0.0
    %v564 = vadd.f32 %v562, %v563
    %v565 = vsel %vm499, %v485, 0.0
    %v566 = vadd.f32 %v564, %v565
    %v567 = vrot.slane %v566, 4
    %v568 = vadd.f32 %v566, %v567
    %v569 = vrot.slane %v568, 2
    %v570 = vadd.f32 %v568, %v569
    %v571 = vrot.slane %v570, 1
    %v572 = vadd.f32 %v570, %v571
    %v573 = vsel %vm216, %v486, 0.0
    %v574 = vsel %vm216, %v487, 0.0
    %v575 = vadd.f32 %v573, %v574
    %v576 = vsel %vm216, %v488, 0.0
    %v577 = vadd.f32 %v575, %v576
    %v578 = vsel %vm499, %v489, 0.0
    %v579 = vadd.f32 %v577, %v578
    %v580 = vrot.slane %v579, 4
    %v581 = vadd.f32 %v579, %v580
    %v582 = vrot.slane %v581, 2
    %v583 = vadd.f32 %v581, %v582
    %v584 = vrot.slane %v583, 1
    %v585 = vadd.f32 %v583, %v584
    %v586 = vsel %vm216, %v490, 0.0
    %v587 = vsel %vm216, %v491, 0.0
    %v588 = vadd.f32 %v586, %v587
    %v589 = vsel %vm216, %v492, 0.0
    %v590 = vadd.f32 %v588, %v589
    %v591 = vsel %vm499, %v493, 0.0
    %v592 = vadd.f32 %v590, %v591
    %v593 = vrot.slane %v592, 4
    %v594 = vadd.f32 %v592, %v593
    %v595 = vrot.slane %v594, 2
    %v596 = vadd.f32 %v594, %v595
    %v597 = vrot.slane %v596, 1
    %v598 = vadd.f32 %v596, %v597
    %v599 = vadd.f32 %v228, %v507
    %v600 = vadd.f32 %v239, %v520
    %v601 = vadd.f32 %v250, %v533
    %v602 = vadd.f32 %v261, %v546
    %v603 = vadd.f32 %v272, %v559
    %v604 = vadd.f32 %v283, %v572
    %v605 = vadd.f32 %v294, %v585
    %v606 = vadd.f32 %v305, %v598
    %v607 = vld [vmem:[#allocation4] sm:$0xff]
    %v608 = vld [vmem:[#allocation4 + $0x8] sm:$0xff]
    %v609 = vld [vmem:[#allocation4 + $0x10] sm:$0xff]
    %v610 = vld [vmem:[#allocation4 + $0x18] sm:$0xff]
    %v611 = vld [vmem:[%s4] sm:$0x1]
    %v613 = vlaneseq
    %v614 = vshrl.u32 %v613, 7
    %v615 = vsub.s32 0, %v614
    %v616 = vrot.slane %v611, %v615
    %vm626 = vcmask 1041409
    %v627 = vsel %vm626, %v600, %v599
    %vm628 = vcmask 1042434
    %v629 = vsel %vm628, %v601, %v627
    %vm630 = vcmask 1043459
    %v631 = vsel %vm630, %v602, %v629
    %vm632 = vcmask 1044484
    %v633 = vsel %vm632, %v603, %v631
    %vm634 = vcmask 1045509
    %v635 = vsel %vm634, %v604, %v633
    %vm636 = vcmask 1046534
    %v637 = vsel %vm636, %v605, %v635
    %vm638 = vcmask 1047559
    %v639 = vsel %vm638, %v606, %v637
    %v640 = vsel %vm216, %v639, 0
    %642 = vmatprep.subr.mxu0 0.0
    %643 = vmatpush1.msra.mxu0 %v607
    %644 = vmatprep.subr.mxu0 0.0
    %645 = vmatpush1.msra.mxu0 %v608
    %646 = vmatprep.subr.mxu0 0.0
    %647 = vmatpush1.msra.mxu0 %v609
    %648 = vmatprep.subr.mxu0 0.0
    %649 = vmatpush1.msra.mxu0 %v610
    %650 = vmatprep.subr.mxu0 0.0
    %651 = vmatpush1.msra.mxu0 0.0
    %652 = vmatprep.subr.mxu0 0.0
    %653 = vmatpush1.msra.mxu0 0.0
    %654 = vmatprep.subr.mxu0 0.0
    %655 = vmatpush1.msra.mxu0 0.0
    %656 = vmatprep.subr.mxu0 0.0
    %657 = vmatpush1.msra.mxu0 0.0
    %658 = vmatprep.subr.mxu0 0.0
    %659 = vmatpush1.msra.mxu0 0.0
    %660 = vmatprep.subr.mxu0 0.0
    %661 = vmatpush1.msra.mxu0 0.0
    %662 = vmatprep.subr.mxu0 0.0
    %663 = vmatpush1.msra.mxu0 0.0
    %664 = vmatprep.subr.mxu0 0.0
    %665 = vmatpush1.msra.mxu0 0.0
    %666 = vmatprep.subr.mxu0 0.0
    %667 = vmatpush1.msra.mxu0 0.0
    %668 = vmatprep.subr.mxu0 0.0
    %669 = vmatpush1.msra.mxu0 0.0
    %670 = vmatprep.subr.mxu0 0.0
    %671 = vmatpush1.msra.mxu0 0.0
    %672 = vmatprep.subr.mxu0 0.0
    %673 = vmatpush1.msra.mxu0 0.0
    %674 = vmatprep.subr.mxu0 0.0
    %675 = vmatpush1.msra.mxu0 0.0
    %676 = vmatprep.subr.mxu0 0.0
    %677 = vmatpush1.msra.mxu0 0.0
    %678 = vmatprep.subr.mxu0 0.0
    %679 = vmatpush1.msra.mxu0 0.0
    %680 = vmatprep.subr.mxu0 0.0
    %681 = vmatpush1.msra.mxu0 0.0
    %682 = vmatprep.subr.mxu0 0.0
    %683 = vmatpush1.msra.mxu0 0.0
    %684 = vmatprep.subr.mxu0 0.0
    %685 = vmatpush1.msra.mxu0 0.0
    %686 = vmatprep.subr.mxu0 0.0
    %687 = vmatpush1.msra.mxu0 0.0
    %688 = vmatprep.subr.mxu0 0.0
    %689 = vmatpush1.msra.mxu0 0.0
    %690 = vmatprep.subr.mxu0 0.0
    %691 = vmatpush1.msra.mxu0 0.0
    %692 = vmatprep.subr.mxu0 0.0
    %693 = vmatpush1.msra.mxu0 0.0
    %694 = vmatprep.subr.mxu0 0.0
    %695 = vmatpush1.msra.mxu0 0.0
    %696 = vmatprep.subr.mxu0 0.0
    %697 = vmatpush1.msra.mxu0 0.0
    %698 = vmatprep.subr.mxu0 0.0
    %699 = vmatpush1.msra.mxu0 0.0
    %700 = vmatprep.subr.mxu0 0.0
    %701 = vmatpush1.msra.mxu0 0.0
    %702 = vmatprep.subr.mxu0 0.0
    %703 = vmatpush1.msra.mxu0 0.0
    %704 = vmatprep.subr.mxu0 0.0
    %705 = vmatpush1.msra.mxu0 0.0
    %706 = vmatprep.mubr.f32.mxu0 0.0
    %707 = vmatmul.mubr.f32.gmra.mrb[0].mxu0 %v640
    %v708 = vpop.f32.mrb[0].mxu0
    %v709 = vadd.f32 %v616, %v708
    %v710 = vpop.f32.mrb[0].mxu0
    %711 = vdwg.mxu0
    %v712 = vtanh.pop %v709
    %v721 = vsel %vm626, %v239, %v228
    %v722 = vsel %vm628, %v250, %v721
    %v723 = vsel %vm630, %v261, %v722
    %v724 = vsel %vm632, %v272, %v723
    %v725 = vsel %vm634, %v283, %v724
    %v726 = vsel %vm636, %v294, %v725
    %v727 = vsel %vm638, %v305, %v726
    %728 = vrot.lane.b32.xlu0 %v727, 32
    %v729 = vpop.permute.xlu0 %728
    %v739 = vsel %vm626, %v520, %v507
    %v740 = vsel %vm628, %v533, %v739
    %v741 = vsel %vm630, %v546, %v740
    %v742 = vsel %vm632, %v559, %v741
    %v743 = vsel %vm634, %v572, %v742
    %v744 = vsel %vm636, %v585, %v743
    %v745 = vsel %vm638, %v598, %v744
    %746 = vrot.lane.b32.xlu0 %v745, 64
    %v747 = vpop.permute.xlu0 %746
    %v749 = vsel %vm216, %v712, %v729
    %vm750 = vcmask 523264
    %v751 = vsel %vm750, %v749, %v747
    %vm752 = vcmask 785408
    %v753 = vsel %vm752, %v751, 0.0
    %754 = vst [vmem:[%s5] sm:$0xff] %v753
    // Predicated region
    $region30: #{encoder_forward.1} parent=1 // pred_check
      _
    $region31: #{encoder_forward.1} parent=1 // pred_check_branch
      %756 = sbr.rel (0) target = $region33
    $region32: #{encoder_forward.1} parent=1 // pred_region
      _
    $region33: #{encoder_forward.1} parent=1 // pred_fallthru
      _
    // Predicated region
    $region34: #{encoder_forward.1} parent=1 // pred_check
      _
    $region35: #{encoder_forward.1} parent=1 // pred_check_branch
      %758 = sbr.rel (0) target = $region37
    $region36: #{encoder_forward.1} parent=1 // pred_region
      _
    $region37: #{encoder_forward.1} parent=1 // pred_fallthru
      _
    %759 = vsyncpa [#allocation3], 1
    %760 = vsyncpa [#allocation5], 1

</llo_original>
